<compile_context>
chip_gen: v7x
topology: tpu7x:2x2x1
jax: 0.10.0
libtpu: 0.0.40
codegen_flags: <defaults>
</compile_context>

<pallas_src>
import jax
import jax.numpy as jnp
from jax.experimental import pallas as pl
from jax.experimental.pallas import tpu as pltpu


_LANES = 128
_SUBLANES = 8


def _cdiv(a, b):
    return -(-a // b)


def _round_up(x, m):
    return ((x + m - 1) // m) * m


def _pack_factor(feature_width):
    """How many observation rows to pack per 128-lane output row."""
    if feature_width <= _LANES and _LANES % feature_width == 0:
        return _LANES // feature_width
    return 1


def _vmem_capacity_bytes():
    """Physical VMEM per TensorCore; conservative fallback = v7x's 64 MiB."""
    try:
        cap = int(getattr(pltpu.get_tpu_info(), "vmem_capacity_bytes"))
        if cap > 0:
            return cap
    except Exception:
        pass
    return 64 * 1024 * 1024


def _tile_plan(out_width, pack, n_rows, resident_bytes):
    """Pick (tile_rows, num_tiles, vmem_limit_bytes).

    Budget accounts for: double-buffered output block, ~3 output-block-sized in-kernel
    temporaries (expand / one-hot / gather partials), the double-buffered (tiny) obs
    block, and 2x the resident inputs (resident blocks are still double-buffered).
    """
    cap = _vmem_capacity_bytes()                       # 64 MiB (v7x) / 128 MiB (v5e, v6e)
    vmem_limit = int(min(cap * 3 // 4, 96 * 1024 * 1024))
    budget = max((vmem_limit * 2) // 3 - 2 * resident_bytes, 1 << 20)
    per_row = (2 + 3) * out_width * 4 + 2 * pack * 4   # out (x2 buf) + temps + obs (x2 buf)
    tr_max = max(_SUBLANES, min(8192, budget // per_row) // _SUBLANES * _SUBLANES)

    n_rows = max(n_rows, 1)
    num_tiles = max(1, _cdiv(n_rows, tr_max))
    if n_rows >= 2 * _SUBLANES:
        num_tiles = max(num_tiles, 2)                  # let both v7x TensorCores get a shard
    tr = _round_up(_cdiv(n_rows, num_tiles), _SUBLANES)
    return tr, num_tiles, vmem_limit


def _one_hot_kernel(obs_ref, sel_ref, cls_ref, out_ref):
    # obs_ref: (TR, P) int32     packed observation indices (P obs per 128-lane output row)
    # sel_ref: (P, P*n_cat) f32  resident lane-expansion selector: sel[p, l] = (l // n_cat == p)
    # cls_ref: (1, P*n_cat) f32  resident class-index row: cls[0, l] = l % n_cat
    # out_ref: (TR, P*n_cat)     packed one-hot, row-major identical to (TR*P, n_cat)
    obs_f = obs_ref[...].astype(jnp.float32)
    # Lane-expand obs with a tiny exact f32 MXU matmul (avoids 1-lane-wide blocks/broadcasts).
    expand = jnp.dot(obs_f, sel_ref[...], preferred_element_type=jnp.float32)
    out_ref[...] = (expand == cls_ref[...]).astype(out_ref.dtype)


def _embedding_kernel(obs_ref, sel_ref, cls_ref, table_ref, out_ref):
    # obs_ref:   (TR, Q) int32      packed observation indices
    # sel_ref:   (Q, Q*n_cat) f32   resident lane-expansion selector
    # cls_ref:   (1, Q*n_cat) f32   resident class-index row
    # table_ref: (n_cat, D) f32     resident PLAIN embedding table (no kron block-diagonal)
    # out_ref:   (TR, Q*D)          packed embeddings, row-major identical to (TR*Q, D)
    n_cat, d = table_ref.shape
    pack = obs_ref.shape[1]
    obs_f = obs_ref[...].astype(jnp.float32)
    expand = jnp.dot(obs_f, sel_ref[...], preferred_element_type=jnp.float32)
    onehot = (expand == cls_ref[...]).astype(jnp.float32)
    table = table_ref[...]
    # Row gather = one small exact MXU matmul per packed slot against the plain table.
    parts = [
        jnp.dot(onehot[:, p * n_cat:(p + 1) * n_cat], table,
                preferred_element_type=jnp.float32)
        for p in range(pack)
    ]
    res = parts[0] if pack == 1 else jnp.concatenate(parts, axis=-1)
    out_ref[...] = res.astype(out_ref.dtype)


class CategoricalFeaturizer:
    def __init__(self, n_cat, one_hot_encode_features, embedding_dimensions=None,
                 *, key=None, output_dtype=jnp.float32):
        self.n_cat = int(n_cat)
        self.one_hot_encode_features = bool(one_hot_encode_features)
        # Default f32 matches the PyTorch contract.  (bf16 one-hot would be exact and halve
        # HBM writes in this HBM-write-bound kernel, but changes the dtype contract.)
        self.output_dtype = output_dtype
        if self.one_hot_encode_features:
            self.embeddings = None
            self._feature_dim = self.n_cat
        else:
            assert embedding_dimensions is not None
            if key is None:
                key = jax.random.PRNGKey(0)
            d = int(embedding_dimensions)
            # nn.Embedding default init: N(0, 1)
            self.embeddings = jax.random.normal(key, (self.n_cat, d), dtype=jnp.float32)
            self._feature_dim = d
        self._pack = _pack_factor(self._feature_dim)
        self._sel = self._make_selector(self._pack, self.n_cat)
        self._cls = (jnp.arange(self._pack * self.n_cat, dtype=jnp.float32)
                     % float(self.n_cat))[None, :]

    @staticmethod
    def _make_selector(pack, n_cat):
        lane = jnp.arange(pack * n_cat, dtype=jnp.int32)
        grp = jnp.arange(pack, dtype=jnp.int32)
        return (lane[None, :] // n_cat == grp[:, None]).astype(jnp.float32)

    def __call__(self, obs):
        obs = jnp.asarray(obs, dtype=jnp.int32)
        lead_shape = obs.shape
        n = int(obs.size)

        d = self._feature_dim
        pack = self._pack
        out_width = pack * d
        sel_width = pack * self.n_cat

        n_rows = _cdiv(max(n, 1), pack)

        resident_bytes = 4 * (pack * sel_width + sel_width)          # selector + cls row
        if not self.one_hot_encode_features:
            resident_bytes += 4 * self.n_cat * d                     # plain embedding table
        tr, num_tiles, vmem_limit = _tile_plan(out_width, pack, n_rows, resident_bytes)
        n_rows_pad = num_tiles * tr
        grid = (num_tiles,)

        flat = obs.reshape(-1)
        pad = n_rows_pad * pack - n
        if pad:
            # Pad with category 0 (a valid index); padded rows are sliced off below.
            # NOTE: out-of-range obs (>= n_cat or < 0) produce all-zero rows instead of
            # raising like torch's F.one_hot / nn.Embedding.
            flat = jnp.pad(flat, (0, pad))
        obs_packed = flat.reshape(n_rows_pad, pack)

        obs_spec = pl.BlockSpec((tr, pack), lambda i: (i, 0))
        sel_spec = pl.BlockSpec(self._sel.shape, lambda i: (0, 0))   # resident across grid
        cls_spec = pl.BlockSpec(self._cls.shape, lambda i: (0, 0))   # resident across grid
        out_spec = pl.BlockSpec((tr, out_width), lambda i: (i, 0))
        cparams = pltpu.CompilerParams(
            dimension_semantics=("parallel",),
            vmem_limit_bytes=int(vmem_limit),
        )

        if self.one_hot_encode_features:
            cost = pl.CostEstimate(
                flops=2 * n_rows_pad * pack * out_width,
                transcendentals=0,
                bytes_accessed=4 * (n_rows_pad * pack + n_rows_pad * out_width)
                               + resident_bytes,
            )
            out = pl.pallas_call(
                _one_hot_kernel,
                out_shape=jax.ShapeDtypeStruct((n_rows_pad, out_width), self.output_dtype),
                grid=grid,
                in_specs=[obs_spec, sel_spec, cls_spec],
                out_specs=out_spec,
                compiler_params=cparams,
                cost_estimate=cost,
            )(obs_packed, self._sel, self._cls)
        else:
            table_spec = pl.BlockSpec(self.embeddings.shape, lambda i: (0, 0))  # resident
            cost = pl.CostEstimate(
                flops=2 * n_rows_pad * pack * sel_width
                      + 2 * n_rows_pad * pack * self.n_cat * d,
                transcendentals=0,
                bytes_accessed=4 * (n_rows_pad * pack + n_rows_pad * out_width)
                               + resident_bytes,
            )
            out = pl.pallas_call(
                _embedding_kernel,
                out_shape=jax.ShapeDtypeStruct((n_rows_pad, out_width), jnp.float32),
                grid=grid,
                in_specs=[obs_spec, sel_spec, cls_spec, table_spec],
                out_specs=out_spec,
                compiler_params=cparams,
                cost_estimate=cost,
            )(obs_packed, self._sel, self._cls, self.embeddings)

        # Packed (R, pack*d) is row-major bit-identical to (R*pack, d); drop the padding rows.
        out = out.reshape(-1, d)[:n]
        return out.reshape(*lead_shape, d)


if __name__ == "__main__":
    key = jax.random.PRNGKey(0)
    k_obs, k_emb = jax.random.split(key)

    n_cat = 16
    emb_dim = 32
    # obs: batch of categorical observations, shape (2, 8), values in [0, n_cat)
    obs = jax.random.randint(k_obs, (2, 8), 0, n_cat, dtype=jnp.int32)

    # Path 1: one-hot featurizer
    feat_oh = CategoricalFeaturizer(n_cat, one_hot_encode_features=True)
    out_oh = jax.block_until_ready(feat_oh(obs))
    ref_oh = jax.nn.one_hot(obs, n_cat, dtype=jnp.float32)
    assert out_oh.shape == (2, 8, n_cat) and out_oh.dtype == jnp.float32
    assert jnp.array_equal(out_oh, ref_oh)

    # Path 2: embedding featurizer
    feat_emb = CategoricalFeaturizer(
        n_cat, one_hot_encode_features=False, embedding_dimensions=emb_dim, key=k_emb
    )
    out_emb = jax.block_until_ready(feat_emb(obs))
    ref_emb = feat_emb.embeddings[obs]
    assert out_emb.shape == (2, 8, emb_dim) and out_emb.dtype == jnp.float32
    assert jnp.allclose(out_emb, ref_emb, atol=1e-6)

    print("KERNEL_OK")
</pallas_src>

<mosaic_0001>
module attributes {stable_mosaic.version = 11 : i64} {
  func.func @_one_hot_kernel(%arg0: i32, %arg1: memref<8x8xi32, #tpu.memory_space<vmem>>, %arg2: memref<8x128xf32, #tpu.memory_space<vmem>>, %arg3: memref<1x128xf32, #tpu.memory_space<vmem>>, %arg4: memref<8x128xf32, #tpu.memory_space<vmem>>) attributes {dimension_semantics = [#tpu.dimension_semantics<parallel>], iteration_bounds = array<i64: 1>, scalar_prefetch = 0 : i64, scratch_operands = 0 : i64, tpu.core_type = #tpu.core_type<tc>, window_params = [{transform_indices = @transform_0, window_bounds = array<i64: 8, 8>}, {pipeline_mode = #tpu.pipeline_mode<synchronous>, transform_indices = @transform_1, window_bounds = array<i64: 8, 128>}, {pipeline_mode = #tpu.pipeline_mode<synchronous>, transform_indices = @transform_2, window_bounds = array<i64: 1, 128>}, {transform_indices = @transform_3, window_bounds = array<i64: 8, 128>}]} {
    %c0 = arith.constant 0 : index
    %c0_0 = arith.constant 0 : index
    %0 = vector.load %arg1[%c0, %c0_0] : memref<8x8xi32, #tpu.memory_space<vmem>>, vector<8x8xi32>
    %1 = arith.sitofp %0 : vector<8x8xi32> to vector<8x8xf32>
    %c0_1 = arith.constant 0 : index
    %c0_2 = arith.constant 0 : index
    %2 = vector.load %arg2[%c0_1, %c0_2] : memref<8x128xf32, #tpu.memory_space<vmem>>, vector<8x128xf32>
    %cst = arith.constant dense<0.000000e+00> : vector<8x128xf32>
    %3 = tpu.matmul %1, %2, %cst {dimension_numbers = #tpu.dot_dimension_numbers<[1], [0], [0], [1], [0, 0, 1, 1], [], []>} : vector<8x8xf32>, vector<8x128xf32>, vector<8x128xf32> -> vector<8x128xf32>
    %c0_3 = arith.constant 0 : index
    %c0_4 = arith.constant 0 : index
    %4 = vector.load %arg3[%c0_3, %c0_4] : memref<1x128xf32, #tpu.memory_space<vmem>>, vector<1x128xf32>
    %5 = vector.broadcast %4 : vector<1x128xf32> to vector<8x128xf32>
    %6 = arith.cmpf oeq, %3, %5 : vector<8x128xf32>
    %7 = arith.extui %6 : vector<8x128xi1> to vector<8x128xi32>
    %8 = arith.sitofp %7 : vector<8x128xi32> to vector<8x128xf32>
    %c0_5 = arith.constant 0 : index
    %c0_6 = arith.constant 0 : index
    %9 = vector.load %arg4[%c0_5, %c0_6] : memref<8x128xf32, #tpu.memory_space<vmem>>, vector<8x128xf32>
    tpu.vector_store %arg4[%c0_5, %c0_6], %8 {strides = array<i32>} : memref<8x128xf32, #tpu.memory_space<vmem>>, vector<8x128xf32>,
    return
  }
  func.func @transform_0(%arg0: i32) -> (i32, i32) {
    %c0_i32 = arith.constant 0 : i32
    %c0_i32_0 = arith.constant 0 : i32
    return %arg0, %c0_i32 : i32, i32
  }
  func.func @transform_1(%arg0: i32) -> (i32, i32) {
    %c0_i32 = arith.constant 0 : i32
    %c0_i32_0 = arith.constant 0 : i32
    %c0_i32_1 = arith.constant 0 : i32
    return %c0_i32, %c0_i32_0 : i32, i32
  }
  func.func @transform_2(%arg0: i32) -> (i32, i32) {
    %c0_i32 = arith.constant 0 : i32
    %c0_i32_0 = arith.constant 0 : i32
    %c0_i32_1 = arith.constant 0 : i32
    return %c0_i32, %c0_i32_0 : i32, i32
  }
  func.func @transform_3(%arg0: i32) -> (i32, i32) {
    %c0_i32 = arith.constant 0 : i32
    %c0_i32_0 = arith.constant 0 : i32
    return %arg0, %c0_i32 : i32, i32
  }
}

</mosaic_0001>

<llo_original>
// kernel: tpu_custom_call.1
$region0: #{tpu_custom_call.1}
  #allocation0 [shape = 'u32[]', space=smem, size = 0x4, offset = 0x4, fixed_abs, tag = 'smem constant byte address 0x4 - core index']
  #allocation1 [shape = 'u32[144,128]{1,0:T(1,128)}', space=vmem, size = 0x12000, scoped, tag = 'internal scratch']
  %s0 = inlined_call_operand.hbm [shape: s32[8,8], index: 0, kind: input, shape index: {}]
  %s1 = inlined_call_operand.hbm [shape: f32[8,128], index: 1, kind: input, shape index: {}]
  %s2 = inlined_call_operand.vmem [shape: f32[1,128], index: 2, kind: input, shape index: {}]
  %s3 = inlined_call_operand.hbm [shape: f32[8,128], index: 3, kind: output, shape index: {}]
  %s4 = sld [smem:[#allocation0]]
  $region30: #{tpu_custom_call.1} parent=0
    _
  %s6 = ssub.s32 1, %s4
  %s7 = scalar_select 0, %s6, %s4
  $region1: #{tpu_custom_call.1} parent=0
    #allocation2 [shape = 'u8[4096]{0}', space=vmem, size = 0x1000, scoped, tag = 'input window, operand 0, single buffered']
    #allocation3 [shape = 's32[1]{0}', space=sflag, size = 0x4, scoped, tag = 'scoped memory for tpu_custom_call.1']
    #allocation4 [shape = 's32[1]{0}', space=sflag, size = 0x4, scoped, tag = 'scoped memory for tpu_custom_call.1']
    #allocation5 [shape = 'u8[4096]{0}', space=vmem, size = 0x1000, scoped, tag = 'input window, operand 1, single buffered']
    #allocation6 [shape = 's32[1]{0}', space=sflag, size = 0x4, scoped, tag = 'scoped memory for tpu_custom_call.1']
    #allocation7 [shape = 'u8[4096]{0}', space=vmem, size = 0x1000, scoped, tag = 'output window, operand 0, single buffered']
    %8 = vsyncpa [#allocation3], 0
    %9 = vsyncpa [#allocation6], 0
    %10 = vsyncpa [#allocation4], 0
    // Predicated region
    $region2: #{tpu_custom_call.1} parent=1 // pred_check
      _
    $region3: #{tpu_custom_call.1} parent=1 // pred_check_branch
      %12 = sbr.rel (0) target = $region5
    $region4: #{tpu_custom_call.1} parent=1 // pred_region
      %s14 = ssub.s32 128, 128
      %15 = vsyncadd [#allocation3], %s14
      %s17 = sshll.u32 [#allocation2], 4
      %s18 = int_to_ptr.vmem [resolvable:$true] %s17
      %20 = dma.hbm_to_vmem [thread:$0]  %s0, 128, %s18, [#allocation3]
    $region5: #{tpu_custom_call.1} parent=1 // pred_fallthru
      _
    // Predicated region
    $region6: #{tpu_custom_call.1} parent=1 // pred_check
      _
    $region7: #{tpu_custom_call.1} parent=1 // pred_check_branch
      %22 = sbr.rel (0) target = $region9
    $region8: #{tpu_custom_call.1} parent=1 // pred_region
      %s24 = ssub.s32 128, 128
      %25 = vsyncadd [#allocation6], %s24
      %s27 = sshll.u32 [#allocation5], 4
      %s28 = int_to_ptr.vmem [resolvable:$true] %s27
      %30 = dma.hbm_to_vmem [thread:$0]  %s1, 128, %s28, [#allocation6]
    $region9: #{tpu_custom_call.1} parent=1 // pred_fallthru
      _
    // Predicated region
    $region10: #{tpu_custom_call.1} parent=1 // pred_check
      _
    $region11: #{tpu_custom_call.1} parent=1 // pred_check_branch
      %32 = sbr.rel (0) target = $region13
    $region12: #{tpu_custom_call.1} parent=1 // pred_region
      _
    $region13: #{tpu_custom_call.1} parent=1 // pred_fallthru
      _
    // Predicated region
    $region14: #{tpu_custom_call.1} parent=1 // pred_check
      _
    $region15: #{tpu_custom_call.1} parent=1 // pred_check_branch
      %34 = sbr.rel (0) target = $region17
    $region16: #{tpu_custom_call.1} parent=1 // pred_region
      %35 = dma.done [#allocation3], 128
    $region17: #{tpu_custom_call.1} parent=1 // pred_fallthru
      _
    // Predicated region
    $region18: #{tpu_custom_call.1} parent=1 // pred_check
      _
    $region19: #{tpu_custom_call.1} parent=1 // pred_check_branch
      %37 = sbr.rel (0) target = $region21
    $region20: #{tpu_custom_call.1} parent=1 // pred_region
      %38 = dma.done [#allocation6], 128
    $region21: #{tpu_custom_call.1} parent=1 // pred_fallthru
      _
    %v39 = vld [vmem:[#allocation2] sm:$0xff]
    %v40 = vcvt.s32.f32 %v39
    %v41 = vld [vmem:[#allocation5] sm:$0xff]
    %vm42 = vcmask 64512
    %v44 = vsel %vm42, %v40, 0
    %46 = vmatprep.subr.mxu0 0.0
    %47 = vmatpush1.msra.mxu0 %v41
    %48 = vmatprep.subr.mxu0 0.0
    %49 = vmatpush1.msra.mxu0 0.0
    %50 = vmatprep.subr.mxu0 0.0
    %51 = vmatpush1.msra.mxu0 0.0
    %52 = vmatprep.subr.mxu0 0.0
    %53 = vmatpush1.msra.mxu0 0.0
    %54 = vmatprep.subr.mxu0 0.0
    %55 = vmatpush1.msra.mxu0 0.0
    %56 = vmatprep.subr.mxu0 0.0
    %57 = vmatpush1.msra.mxu0 0.0
    %58 = vmatprep.subr.mxu0 0.0
    %59 = vmatpush1.msra.mxu0 0.0
    %60 = vmatprep.subr.mxu0 0.0
    %61 = vmatpush1.msra.mxu0 0.0
    %62 = vmatprep.subr.mxu0 0.0
    %63 = vmatpush1.msra.mxu0 0.0
    %64 = vmatprep.subr.mxu0 0.0
    %65 = vmatpush1.msra.mxu0 0.0
    %66 = vmatprep.subr.mxu0 0.0
    %67 = vmatpush1.msra.mxu0 0.0
    %68 = vmatprep.subr.mxu0 0.0
    %69 = vmatpush1.msra.mxu0 0.0
    %70 = vmatprep.subr.mxu0 0.0
    %71 = vmatpush1.msra.mxu0 0.0
    %72 = vmatprep.subr.mxu0 0.0
    %73 = vmatpush1.msra.mxu0 0.0
    %74 = vmatprep.subr.mxu0 0.0
    %75 = vmatpush1.msra.mxu0 0.0
    %76 = vmatprep.subr.mxu0 0.0
    %77 = vmatpush1.msra.mxu0 0.0
    %78 = vmatprep.subr.mxu0 0.0
    %79 = vmatpush1.msra.mxu0 0.0
    %80 = vmatprep.subr.mxu0 0.0
    %81 = vmatpush1.msra.mxu0 0.0
    %82 = vmatprep.subr.mxu0 0.0
    %83 = vmatpush1.msra.mxu0 0.0
    %84 = vmatprep.subr.mxu0 0.0
    %85 = vmatpush1.msra.mxu0 0.0
    %86 = vmatprep.subr.mxu0 0.0
    %87 = vmatpush1.msra.mxu0 0.0
    %88 = vmatprep.subr.mxu0 0.0
    %89 = vmatpush1.msra.mxu0 0.0
    %90 = vmatprep.subr.mxu0 0.0
    %91 = vmatpush1.msra.mxu0 0.0
    %92 = vmatprep.subr.mxu0 0.0
    %93 = vmatpush1.msra.mxu0 0.0
    %94 = vmatprep.subr.mxu0 0.0
    %95 = vmatpush1.msra.mxu0 0.0
    %96 = vmatprep.subr.mxu0 0.0
    %97 = vmatpush1.msra.mxu0 0.0
    %98 = vmatprep.subr.mxu0 0.0
    %99 = vmatpush1.msra.mxu0 0.0
    %100 = vmatprep.subr.mxu0 0.0
    %101 = vmatpush1.msra.mxu0 0.0
    %102 = vmatprep.subr.mxu0 0.0
    %103 = vmatpush1.msra.mxu0 0.0
    %104 = vmatprep.subr.mxu0 0.0
    %105 = vmatpush1.msra.mxu0 0.0
    %106 = vmatprep.subr.mxu0 0.0
    %107 = vmatpush1.msra.mxu0 0.0
    %108 = vmatprep.subr.mxu0 0.0
    %109 = vmatpush1.msra.mxu0 0.0
    %110 = vmatprep.mubr.f32.mxu0 0.0
    %111 = vmatmul.mubr.f32.gmra.mrb[0].mxu0 %v44
    %v112 = vpop.f32.mrb[0].mxu0
    %v113 = vadd.f32 0.0, %v112
    %v114 = vpop.f32.mrb[0].mxu0
    %115 = vdwg.mxu0
    %v116 = vld [vmem:[%s2] sm:$0x1]
    %v118 = vlaneseq
    %v119 = vshrl.u32 %v118, 7
    %v120 = vsub.s32 0, %v119
    %v121 = vrot.slane %v116, %v120
    %vm123 = vcmp.eq.f32.partialorder %v113, %v121
    %v124 = vsel %vm123, 1, 0
    %v125 = vcvt.s32.f32 %v124
    %126 = vst [vmem:[#allocation7] sm:$0xff] %v125
    // Predicated region
    $region22: #{tpu_custom_call.1} parent=1 // pred_check
      _
    $region23: #{tpu_custom_call.1} parent=1 // pred_check_branch
      %128 = sbr.rel (0) target = $region25
    $region24: #{tpu_custom_call.1} parent=1 // pred_region
      %s130 = ssub.s32 128, 128
      %131 = vsyncadd [#allocation4], %s130
      %s133 = sshll.u32 [#allocation7], 4
      %s134 = int_to_ptr.vmem [resolvable:$true] %s133
      %136 = dma.vmem_to_hbm [thread:$0]  %s134, 128, %s3, [#allocation4]
    $region25: #{tpu_custom_call.1} parent=1 // pred_fallthru
      _
    // Predicated region
    $region26: #{tpu_custom_call.1} parent=1 // pred_check
      _
    $region27: #{tpu_custom_call.1} parent=1 // pred_check_branch
      %138 = sbr.rel (0) target = $region29
    $region28: #{tpu_custom_call.1} parent=1 // pred_region
      %139 = dma.done [#allocation4], 128
    $region29: #{tpu_custom_call.1} parent=1 // pred_fallthru
      _
    %140 = vsyncpa [#allocation3], 1
    %141 = vsyncpa [#allocation6], 1
    %142 = vsyncpa [#allocation4], 1

</llo_original>
